<compile_context>
chip_gen: v5e
topology: v5e:2x2
jax: 0.10.0
libtpu: 0.0.40
codegen_flags: <defaults>
</compile_context>

<pallas_src>
import functools
import math

import jax
import jax.numpy as jnp
from jax.experimental import pallas as pl
from jax.experimental.pallas import tpu as pltpu

_LANE = 128


def _round_up(x, m):
    return ((x + m - 1) // m) * m


# ----------------------------------------------------------------------------
# VMEM budgeting (generation-aware)
# ----------------------------------------------------------------------------

def _vmem_caps():
    """Per-TensorCore working-set budget and hard vmem_limit_bytes cap."""
    try:
        cap = int(pltpu.get_tpu_info().vmem_capacity_bytes)
    except Exception:
        cap = 64 << 20                 # conservative fallback: v7x per-TC VMEM
    cap = min(cap, 128 << 20)          # never assume more than v5e/v6e physical
    budget = int(cap * 0.55)           # per-layer working-set target (headroom
                                       # for compiler-internal scratch / spill)
    limit_cap = int(cap * 0.90)        # never push vmem_limit past physical
    return budget, limit_cap


def _resident_bytes(tm, n_pad, k_pad, d_pad, out_bytes=4):
    """VMEM working set for the resident-H path (H/W/b single-buffered)."""
    return (2 * tm * n_pad * 2          # A row tile (bf16), double-buffered
            + n_pad * k_pad * 2         # H (bf16), Buffered(1) resident
            + k_pad * d_pad * 2         # W (bf16), Buffered(1) resident
            + d_pad * 4                 # bias (f32), Buffered(1)
            + 2 * tm * d_pad * out_bytes  # output tile, double-buffered
            + tm * k_pad * 4            # f32 support temp s = A_tile @ H
            + tm * d_pad * 4)           # f32 pre-activation temp


def _ktiled_bytes(tm, tk, k_pad, d_pad, out_bytes=4):
    """VMEM working set for the contraction-tiled fallback path."""
    return (2 * tm * tk * 2             # A (row, k) tile (bf16), 2 buffers
            + 2 * tk * k_pad * 2        # H k-tile (bf16), 2 buffers
            + k_pad * d_pad * 2         # W (bf16), Buffered(1)
            + d_pad * 4                 # bias (f32), Buffered(1)
            + 2 * tm * d_pad * out_bytes  # output tile, 2 buffers
            + tm * k_pad * 4            # f32 accumulator scratch
            + tm * d_pad * 4)           # f32 pre-activation temp


def _choose_plan(n, in_pad, hid_pad, out_pad, tm_req, tk_req, force_k_tiled):
    """Pick (mode, tm, tk, n_pad) shared by all 3 layers from the VMEM budget."""
    budget, limit_cap = _vmem_caps()
    n_lane = _round_up(max(int(n), 1), _LANE)
    k_max = max(in_pad, hid_pad)        # widest H across the 3 layers
    d_max = max(hid_pad, out_pad)       # widest output across the 3 layers

    if tm_req is not None:
        assert tm_req % 16 == 0, "tm must be a multiple of 16 (bf16 sublanes)"
    if tk_req is not None:
        assert tk_req % _LANE == 0, "tk must be a multiple of 128 (lanes)"

    tm_candidates = [tm_req] if tm_req is not None else [512, 256, 128]

    if not force_k_tiled:
        # Resident-H path: whole H/W/b live in VMEM (single-buffered), A row
        # tiles stream through a double-buffered BlockSpec pipeline.
        for cand in tm_candidates:
            tm = min(cand, n_lane)
            n_pad = _round_up(n_lane, tm)
            if _resident_bytes(tm, n_pad, k_max, d_max) <= budget:
                return dict(mode="resident", tm=tm, tk=None, n_pad=n_pad,
                            limit_cap=limit_cap)

    # Contraction-tiled fallback: neither full H nor a full-width A row tile
    # needs to fit in VMEM, so max N is HBM-bound, not VMEM-bound. Prefer a
    # large tm: H is re-streamed once per row tile (extra traffic ~ k_pad/tm
    # of the A traffic), so a big tm keeps that overhead small.
    plan = None
    for cand in tm_candidates:
        tm = min(cand, n_lane)
        tk = min(tk_req if tk_req is not None else 512, n_lane)
        n_pad = _round_up(n_lane, math.lcm(tm, tk))
        plan = dict(mode="ktiled", tm=tm, tk=tk, n_pad=n_pad,
                    limit_cap=limit_cap)
        if _ktiled_bytes(tm, tk, k_max, d_max) <= budget:
            break
    return plan


# ----------------------------------------------------------------------------
# Kernels
# ----------------------------------------------------------------------------

def _gcn_layer_kernel(a_ref, h_ref, w_ref, b_ref, o_ref, *, apply_relu):
    """Resident-H GCN layer on a tile of adjacency rows.

    a_ref : (tm, n_pad)     bf16  row tile of A (streamed, double-buffered)
    h_ref : (n_pad, k_pad)  bf16  full node-feature matrix (Buffered(1))
    w_ref : (k_pad, d_pad)  bf16  pre-transposed, zero-padded weight (Buffered(1))
    b_ref : (1, d_pad)      f32   zero-padded bias row (Buffered(1))
    o_ref : (tm, d_pad)           output row tile (bf16 hidden / f32 final)
    """
    # Graph propagation: bf16 MXU inputs, f32 accumulation.
    s = jnp.dot(a_ref[...], h_ref[...], preferred_element_type=jnp.float32)
    # Linear: cast support back to bf16 for the MXU, accumulate in f32.
    y = jnp.dot(s.astype(jnp.bfloat16), w_ref[...],
                preferred_element_type=jnp.float32)
    # Bias add + activation in f32 (v5e VPU/EUP have no bf16 elementwise).
    y = y + b_ref[...]
    if apply_relu:
        y = jnp.maximum(y, 0.0)
    o_ref[...] = y.astype(o_ref.dtype)


def _gcn_layer_ktiled_kernel(a_ref, h_ref, w_ref, b_ref, o_ref, acc_ref, *,
                             apply_relu):
    """Contraction-tiled GCN layer: accumulate s = A_tile @ H over N in an f32
    scratch; apply linear + bias + activation on the last reduction step.

    a_ref  : (tm, tk)        bf16  A tile (row tile i, contraction tile k)
    h_ref  : (tk, k_pad)     bf16  H contraction tile (streamed over k)
    w_ref  : (k_pad, d_pad)  bf16  resident weight (Buffered(1))
    b_ref  : (1, d_pad)      f32   resident bias (Buffered(1))
    o_ref  : (tm, d_pad)           output row tile (written on last k only)
    acc_ref: (tm, k_pad)     f32   support accumulator (VMEM scratch)
    """
    k = pl.program_id(1)

    @pl.when(k == 0)
    def _():
        acc_ref[...] = jnp.zeros_like(acc_ref)

    acc_ref[...] += jnp.dot(a_ref[...], h_ref[...],
                            preferred_element_type=jnp.float32)

    @pl.when(k == pl.num_programs(1) - 1)
    def _():
        y = jnp.dot(acc_ref[...].astype(jnp.bfloat16), w_ref[...],
                    preferred_element_type=jnp.float32)
        y = y + b_ref[...]
        if apply_relu:
            y = jnp.maximum(y, 0.0)
        o_ref[...] = y.astype(o_ref.dtype)


# ----------------------------------------------------------------------------
# Per-layer pallas_call wrappers
# ----------------------------------------------------------------------------

def _gcn_layer(a_p, h_p, w_p, b_p, *, apply_relu, out_dtype, plan):
    """Run one fused GCN layer over padded operands."""
    n_pad = a_p.shape[0]
    k_pad, d_pad = w_p.shape
    tm = plan["tm"]
    out_bytes = jnp.dtype(out_dtype).itemsize
    resident = pl.Buffered(1)   # single-buffer grid-invariant operands

    if plan["mode"] == "resident":
        assert n_pad % tm == 0, (n_pad, tm)
        est = _resident_bytes(tm, n_pad, k_pad, d_pad, out_bytes)
        vmem_bytes = min(max(int(est * 1.3), 4 << 20), plan["limit_cap"])
        kernel = functools.partial(_gcn_layer_kernel, apply_relu=apply_relu)
        return pl.pallas_call(
            kernel,
            out_shape=jax.ShapeDtypeStruct((n_pad, d_pad), out_dtype),
            grid=(n_pad // tm,),
            in_specs=[
                pl.BlockSpec((tm, n_pad), lambda i: (i, 0)),     # A row tile
                pl.BlockSpec((n_pad, k_pad), lambda i: (0, 0),
                             pipeline_mode=resident),            # H resident
                pl.BlockSpec((k_pad, d_pad), lambda i: (0, 0),
                             pipeline_mode=resident),            # W resident
                pl.BlockSpec((1, d_pad), lambda i: (0, 0),
                             pipeline_mode=resident),            # bias
            ],
            out_specs=pl.BlockSpec((tm, d_pad), lambda i: (i, 0)),
            compiler_params=pltpu.CompilerParams(
                # "parallel" shards the row tiles across v7x's 2 TensorCores;
                # it is a no-op on single-TC v5e/v6e.
                dimension_semantics=("parallel",),
                vmem_limit_bytes=vmem_bytes),
        )(a_p, h_p, w_p, b_p)

    # Contraction-tiled fallback (large N).
    tk = plan["tk"]
    assert n_pad % tm == 0 and n_pad % tk == 0, (n_pad, tm, tk)
    est = _ktiled_bytes(tm, tk, k_pad, d_pad, out_bytes)
    vmem_bytes = min(max(int(est * 1.3), 4 << 20), plan["limit_cap"])
    kernel = functools.partial(_gcn_layer_ktiled_kernel, apply_relu=apply_relu)
    return pl.pallas_call(
        kernel,
        out_shape=jax.ShapeDtypeStruct((n_pad, d_pad), out_dtype),
        grid=(n_pad // tm, n_pad // tk),
        in_specs=[
            pl.BlockSpec((tm, tk), lambda i, k: (i, k)),         # A tile
            pl.BlockSpec((tk, k_pad), lambda i, k: (k, 0)),      # H k-tile
            pl.BlockSpec((k_pad, d_pad), lambda i, k: (0, 0),
                         pipeline_mode=resident),                # W resident
            pl.BlockSpec((1, d_pad), lambda i, k: (0, 0),
                         pipeline_mode=resident),                # bias
        ],
        out_specs=pl.BlockSpec((tm, d_pad), lambda i, k: (i, 0)),
        scratch_shapes=[pltpu.VMEM((tm, k_pad), jnp.float32)],
        compiler_params=pltpu.CompilerParams(
            dimension_semantics=("parallel", "arbitrary"),
            vmem_limit_bytes=vmem_bytes),
    )(a_p, h_p, w_p, b_p)


# ----------------------------------------------------------------------------
# Full forward
# ----------------------------------------------------------------------------

def attention_gcn_forward(adjacency, node_features, params, *, tm=None, tk=None,
                          force_k_tiled=False):
    """Full AttentionGCN forward. Pads to lane multiples, runs 3 fused layer
    kernels (bf16 MXU / f32 accumulate), slices padding off the result."""
    (w1, b1), (w2, b2), (w3, b3) = params
    n = adjacency.shape[0]
    input_dim = node_features.shape[1]
    hidden_dim = w1.shape[0]
    output_dim = w3.shape[0]

    in_pad = _round_up(input_dim, _LANE)
    hid_pad = _round_up(hidden_dim, _LANE)
    out_pad = _round_up(output_dim, _LANE)

    plan = _choose_plan(n, in_pad, hid_pad, out_pad, tm, tk, force_k_tiled)
    n_pad = plan["n_pad"]

    # bf16 MXU inputs; zero-padding of A's extra rows/cols keeps real rows exact.
    # (Accuracy-gated option, not enabled: quantize A to int8 on v5e/v6e or fp8
    #  on v7x with per-row scales to halve the dominant HBM stream.)
    a_p = jnp.zeros((n_pad, n_pad), jnp.bfloat16)
    a_p = a_p.at[:n, :n].set(adjacency.astype(jnp.bfloat16))
    x_p = jnp.zeros((n_pad, in_pad), jnp.bfloat16)
    x_p = x_p.at[:n, :input_dim].set(node_features.astype(jnp.bfloat16))

    def pad_linear(w, b, k_pad, d_pad):
        # PyTorch Linear stores W as (out, in); pre-transpose to (in, out).
        wt = w.T
        w_p = jnp.zeros((k_pad, d_pad), jnp.bfloat16)
        w_p = w_p.at[:wt.shape[0], :wt.shape[1]].set(wt.astype(jnp.bfloat16))
        b_p = jnp.zeros((1, d_pad), jnp.float32)
        b_p = b_p.at[0, :b.shape[0]].set(b.astype(jnp.float32))
        return w_p, b_p

    w1_p, b1_p = pad_linear(w1, b1, in_pad, hid_pad)
    w2_p, b2_p = pad_linear(w2, b2, hid_pad, hid_pad)
    w3_p, b3_p = pad_linear(w3, b3, hid_pad, out_pad)

    h1 = _gcn_layer(a_p, x_p, w1_p, b1_p, apply_relu=True,
                    out_dtype=jnp.bfloat16, plan=plan)
    h2 = _gcn_layer(a_p, h1, w2_p, b2_p, apply_relu=True,
                    out_dtype=jnp.bfloat16, plan=plan)
    out = _gcn_layer(a_p, h2, w3_p, b3_p, apply_relu=False,
                     out_dtype=jnp.float32, plan=plan)

    return out[:n, :output_dim]


# ----------------------------------------------------------------------------
# Reference, params, inputs
# ----------------------------------------------------------------------------

def init_params(key, input_dim, hidden_dim, output_dim):
    """PyTorch-style Linear init: U(-1/sqrt(fan_in), 1/sqrt(fan_in))."""
    def linear(k, in_dim, out_dim):
        kw, kb = jax.random.split(k)
        bound = 1.0 / jnp.sqrt(in_dim)
        w = jax.random.uniform(kw, (out_dim, in_dim), jnp.float32, -bound, bound)
        b = jax.random.uniform(kb, (out_dim,), jnp.float32, -bound, bound)
        return w, b

    k1, k2, k3 = jax.random.split(key, 3)
    return (linear(k1, input_dim, hidden_dim),
            linear(k2, hidden_dim, hidden_dim),
            linear(k3, hidden_dim, output_dim))


def _reference_forward(adjacency, node_features, params):
    """Pure-JAX f32 reference matching the PyTorch module exactly."""
    (w1, b1), (w2, b2), (w3, b3) = params
    h1 = jax.nn.relu((adjacency @ node_features) @ w1.T + b1)
    h2 = jax.nn.relu((adjacency @ h1) @ w2.T + b2)
    return (adjacency @ h2) @ w3.T + b3


def _make_inputs(key, n, input_dim):
    k_adj, k_feat = jax.random.split(key)
    raw = jax.random.uniform(k_adj, (n, n), jnp.float32)
    adjacency = (raw + raw.T) * 0.5 + jnp.eye(n, dtype=jnp.float32)
    adjacency = adjacency / jnp.sum(adjacency, axis=1, keepdims=True)
    node_features = jax.random.normal(k_feat, (n, input_dim), jnp.float32)
    return adjacency, node_features


if __name__ == "__main__":
    key = jax.random.PRNGKey(0)
    k_in1, k_p1, k_in2, k_p2 = jax.random.split(key, 4)

    forward = jax.jit(attention_gcn_forward,
                      static_argnames=("tm", "tk", "force_k_tiled"))

    # --- Case 1: small shapes consistent with the module (auto plan) ---
    N, INPUT_DIM, HIDDEN_DIM, OUTPUT_DIM = 8, 16, 32, 8
    adjacency, node_features = _make_inputs(k_in1, N, INPUT_DIM)
    params = init_params(k_p1, INPUT_DIM, HIDDEN_DIM, OUTPUT_DIM)

    out = jax.block_until_ready(forward(adjacency, node_features, params))
    ref = _reference_forward(adjacency, node_features, params)
    assert out.shape == (N, OUTPUT_DIM)
    err = float(jnp.max(jnp.abs(out - ref)))
    # bf16 MXU inputs -> looser tolerance than pure f32.
    assert err < 3e-2, f"mismatch vs reference (case 1): max abs err {err}"

    # --- Case 2: dim/row padding with the auto-selected (larger) row tile ---
    N2, IN2, HID2, OUT2 = 200, 48, 96, 10
    adjacency2, node_features2 = _make_inputs(k_in2, N2, IN2)
    params2 = init_params(k_p2, IN2, HID2, OUT2)

    out2 = jax.block_until_ready(forward(adjacency2, node_features2, params2))
    ref2 = _reference_forward(adjacency2, node_features2, params2)
    assert out2.shape == (N2, OUT2)
    err2 = float(jnp.max(jnp.abs(out2 - ref2)))
    assert err2 < 5e-2, f"mismatch vs reference (case 2): max abs err {err2}"

    # --- Case 3: multi-step row-tiled grid on the resident-H path ---
    out3 = jax.block_until_ready(
        forward(adjacency2, node_features2, params2, tm=128))
    err3 = float(jnp.max(jnp.abs(out3 - ref2)))
    assert err3 < 5e-2, f"mismatch vs reference (case 3): max abs err {err3}"

    # --- Case 4: contraction-tiled fallback path (grid=(2, 2)) ---
    out4 = jax.block_until_ready(
        forward(adjacency2, node_features2, params2,
                tm=128, tk=128, force_k_tiled=True))
    err4 = float(jnp.max(jnp.abs(out4 - ref2)))
    assert err4 < 5e-2, f"mismatch vs reference (case 4): max abs err {err4}"

    print("KERNEL_OK")
</pallas_src>

<mosaic_0001>
module attributes {stable_mosaic.version = 11 : i64} {
  func.func @_gcn_layer_kernel(%arg0: i32, %arg1: memref<128x128xbf16, #tpu.memory_space<vmem>>, %arg2: memref<128x128xbf16, #tpu.memory_space<vmem>>, %arg3: memref<128x128xbf16, #tpu.memory_space<vmem>>, %arg4: memref<1x128xf32, #tpu.memory_space<vmem>>, %arg5: memref<128x128xf32, #tpu.memory_space<vmem>>) attributes {dimension_semantics = [#tpu.dimension_semantics<parallel>], iteration_bounds = array<i64: 1>, scalar_prefetch = 0 : i64, scratch_operands = 0 : i64, tpu.core_type = #tpu.core_type<tc>, window_params = [{transform_indices = @transform_0, window_bounds = array<i64: 128, 128>}, {pipeline_mode = #tpu.pipeline_mode<synchronous>, transform_indices = @transform_1, window_bounds = array<i64: 128, 128>}, {pipeline_mode = #tpu.pipeline_mode<synchronous>, transform_indices = @transform_2, window_bounds = array<i64: 128, 128>}, {pipeline_mode = #tpu.pipeline_mode<synchronous>, transform_indices = @transform_3, window_bounds = array<i64: 1, 128>}, {transform_indices = @transform_4, window_bounds = array<i64: 128, 128>}]} {
    %c0 = arith.constant 0 : index
    %c0_0 = arith.constant 0 : index
    %0 = vector.load %arg1[%c0, %c0_0] : memref<128x128xbf16, #tpu.memory_space<vmem>>, vector<128x128xbf16>
    %c0_1 = arith.constant 0 : index
    %c0_2 = arith.constant 0 : index
    %1 = vector.load %arg2[%c0_1, %c0_2] : memref<128x128xbf16, #tpu.memory_space<vmem>>, vector<128x128xbf16>
    %cst = arith.constant dense<0.000000e+00> : vector<128x128xf32>
    %2 = tpu.matmul %0, %1, %cst {dimension_numbers = #tpu.dot_dimension_numbers<[1], [0], [0], [1], [0, 0, 1, 1], [], []>} : vector<128x128xbf16>, vector<128x128xbf16>, vector<128x128xf32> -> vector<128x128xf32>
    %3 = arith.truncf %2 : vector<128x128xf32> to vector<128x128xbf16>
    %c0_3 = arith.constant 0 : index
    %c0_4 = arith.constant 0 : index
    %4 = vector.load %arg3[%c0_3, %c0_4] : memref<128x128xbf16, #tpu.memory_space<vmem>>, vector<128x128xbf16>
    %cst_5 = arith.constant dense<0.000000e+00> : vector<128x128xf32>
    %5 = tpu.matmul %3, %4, %cst_5 {dimension_numbers = #tpu.dot_dimension_numbers<[1], [0], [0], [1], [0, 0, 1, 1], [], []>} : vector<128x128xbf16>, vector<128x128xbf16>, vector<128x128xf32> -> vector<128x128xf32>
    %c0_6 = arith.constant 0 : index
    %c0_7 = arith.constant 0 : index
    %6 = vector.load %arg4[%c0_6, %c0_7] : memref<1x128xf32, #tpu.memory_space<vmem>>, vector<1x128xf32>
    %7 = vector.broadcast %6 : vector<1x128xf32> to vector<128x128xf32>
    %8 = arith.addf %5, %7 : vector<128x128xf32>
    %c0_8 = arith.constant 0 : index
    %c0_9 = arith.constant 0 : index
    %9 = vector.load %arg5[%c0_8, %c0_9] : memref<128x128xf32, #tpu.memory_space<vmem>>, vector<128x128xf32>
    tpu.vector_store %arg5[%c0_8, %c0_9], %8 {strides = array<i32>} : memref<128x128xf32, #tpu.memory_space<vmem>>, vector<128x128xf32>,
    return
  }
  func.func @transform_0(%arg0: i32) -> (i32, i32) {
    %c0_i32 = arith.constant 0 : i32
    %c0_i32_0 = arith.constant 0 : i32
    return %arg0, %c0_i32 : i32, i32
  }
  func.func @transform_1(%arg0: i32) -> (i32, i32) {
    %c0_i32 = arith.constant 0 : i32
    %c0_i32_0 = arith.constant 0 : i32
    %c0_i32_1 = arith.constant 0 : i32
    return %c0_i32, %c0_i32_0 : i32, i32
  }
  func.func @transform_2(%arg0: i32) -> (i32, i32) {
    %c0_i32 = arith.constant 0 : i32
    %c0_i32_0 = arith.constant 0 : i32
    %c0_i32_1 = arith.constant 0 : i32
    return %c0_i32, %c0_i32_0 : i32, i32
  }
  func.func @transform_3(%arg0: i32) -> (i32, i32) {
    %c0_i32 = arith.constant 0 : i32
    %c0_i32_0 = arith.constant 0 : i32
    %c0_i32_1 = arith.constant 0 : i32
    return %c0_i32, %c0_i32_0 : i32, i32
  }
  func.func @transform_4(%arg0: i32) -> (i32, i32) {
    %c0_i32 = arith.constant 0 : i32
    %c0_i32_0 = arith.constant 0 : i32
    return %arg0, %c0_i32 : i32, i32
  }
}

module attributes {stable_mosaic.version = 11 : i64} {
  func.func @_gcn_layer_kernel(%arg0: i32, %arg1: memref<128x128xbf16, #tpu.memory_space<vmem>>, %arg2: memref<128x128xbf16, #tpu.memory_space<vmem>>, %arg3: memref<128x128xbf16, #tpu.memory_space<vmem>>, %arg4: memref<1x128xf32, #tpu.memory_space<vmem>>, %arg5: memref<128x128xbf16, #tpu.memory_space<vmem>>) attributes {dimension_semantics = [#tpu.dimension_semantics<parallel>], iteration_bounds = array<i64: 1>, scalar_prefetch = 0 : i64, scratch_operands = 0 : i64, tpu.core_type = #tpu.core_type<tc>, window_params = [{transform_indices = @transform_0, window_bounds = array<i64: 128, 128>}, {pipeline_mode = #tpu.pipeline_mode<synchronous>, transform_indices = @transform_1, window_bounds = array<i64: 128, 128>}, {pipeline_mode = #tpu.pipeline_mode<synchronous>, transform_indices = @transform_2, window_bounds = array<i64: 128, 128>}, {pipeline_mode = #tpu.pipeline_mode<synchronous>, transform_indices = @transform_3, window_bounds = array<i64: 1, 128>}, {transform_indices = @transform_4, window_bounds = array<i64: 128, 128>}]} {
    %c0 = arith.constant 0 : index
    %c0_0 = arith.constant 0 : index
    %0 = vector.load %arg1[%c0, %c0_0] : memref<128x128xbf16, #tpu.memory_space<vmem>>, vector<128x128xbf16>
    %c0_1 = arith.constant 0 : index
    %c0_2 = arith.constant 0 : index
    %1 = vector.load %arg2[%c0_1, %c0_2] : memref<128x128xbf16, #tpu.memory_space<vmem>>, vector<128x128xbf16>
    %cst = arith.constant dense<0.000000e+00> : vector<128x128xf32>
    %2 = tpu.matmul %0, %1, %cst {dimension_numbers = #tpu.dot_dimension_numbers<[1], [0], [0], [1], [0, 0, 1, 1], [], []>} : vector<128x128xbf16>, vector<128x128xbf16>, vector<128x128xf32> -> vector<128x128xf32>
    %3 = arith.truncf %2 : vector<128x128xf32> to vector<128x128xbf16>
    %c0_3 = arith.constant 0 : index
    %c0_4 = arith.constant 0 : index
    %4 = vector.load %arg3[%c0_3, %c0_4] : memref<128x128xbf16, #tpu.memory_space<vmem>>, vector<128x128xbf16>
    %cst_5 = arith.constant dense<0.000000e+00> : vector<128x128xf32>
    %5 = tpu.matmul %3, %4, %cst_5 {dimension_numbers = #tpu.dot_dimension_numbers<[1], [0], [0], [1], [0, 0, 1, 1], [], []>} : vector<128x128xbf16>, vector<128x128xbf16>, vector<128x128xf32> -> vector<128x128xf32>
    %c0_6 = arith.constant 0 : index
    %c0_7 = arith.constant 0 : index
    %6 = vector.load %arg4[%c0_6, %c0_7] : memref<1x128xf32, #tpu.memory_space<vmem>>, vector<1x128xf32>
    %7 = vector.broadcast %6 : vector<1x128xf32> to vector<128x128xf32>
    %8 = arith.addf %5, %7 : vector<128x128xf32>
    %cst_8 = arith.constant 0.000000e+00 : f32
    %9 = vector.broadcast %cst_8 : f32 to vector<128x128xf32>
    %10 = arith.maximumf %8, %9 : vector<128x128xf32>
    %11 = arith.truncf %10 : vector<128x128xf32> to vector<128x128xbf16>
    %c0_9 = arith.constant 0 : index
    %c0_10 = arith.constant 0 : index
    %12 = vector.load %arg5[%c0_9, %c0_10] : memref<128x128xbf16, #tpu.memory_space<vmem>>, vector<128x128xbf16>
    tpu.vector_store %arg5[%c0_9, %c0_10], %11 {strides = array<i32>} : memref<128x128xbf16, #tpu.memory_space<vmem>>, vector<128x128xbf16>,
    return
  }
  func.func @transform_0(%arg0: i32) -> (i32, i32) {
    %c0_i32 = arith.constant 0 : i32
    %c0_i32_0 = arith.constant 0 : i32
    return %arg0, %c0_i32 : i32, i32
  }
  func.func @transform_1(%arg0: i32) -> (i32, i32) {
    %c0_i32 = arith.constant 0 : i32
    %c0_i32_0 = arith.constant 0 : i32
    %c0_i32_1 = arith.constant 0 : i32
    return %c0_i32, %c0_i32_0 : i32, i32
  }
  func.func @transform_2(%arg0: i32) -> (i32, i32) {
    %c0_i32 = arith.constant 0 : i32
    %c0_i32_0 = arith.constant 0 : i32
    %c0_i32_1 = arith.constant 0 : i32
    return %c0_i32, %c0_i32_0 : i32, i32
  }
  func.func @transform_3(%arg0: i32) -> (i32, i32) {
    %c0_i32 = arith.constant 0 : i32
    %c0_i32_0 = arith.constant 0 : i32
    %c0_i32_1 = arith.constant 0 : i32
    return %c0_i32, %c0_i32_0 : i32, i32
  }
  func.func @transform_4(%arg0: i32) -> (i32, i32) {
    %c0_i32 = arith.constant 0 : i32
    %c0_i32_0 = arith.constant 0 : i32
    return %arg0, %c0_i32 : i32, i32
  }
}

</mosaic_0001>

<llo_original>
// kernel: attention_gcn_forward.5
$region0: #{attention_gcn_forward.5}
  #allocation0 [shape = 'u32[]', space=smem, size = 0x4, offset = 0x4, fixed_abs, tag = 'smem constant byte address 0x4 - core index']
  #allocation1 [shape = 'u32[72,128]{1,0:T(1,128)}', space=vmem, size = 0x9000, scoped, tag = 'internal scratch']
  %s0 = inlined_call_operand.vmem [shape: bf16[128,128], index: 0, kind: input, shape index: {}]
  %s1 = inlined_call_operand.vmem [shape: bf16[128,128], index: 1, kind: input, shape index: {}]
  %s2 = inlined_call_operand.vmem [shape: bf16[128,128], index: 2, kind: input, shape index: {}]
  %s3 = inlined_call_operand.vmem [shape: f32[1,128], index: 3, kind: input, shape index: {}]
  %s4 = inlined_call_operand.vmem [shape: f32[128,128], index: 4, kind: output, shape index: {}]
  %s5 = sld [smem:[#allocation0]]
  $region26: #{attention_gcn_forward.5} parent=0
    _
  %s7 = ssub.s32 1, %s5
  %s8 = scalar_select 0, %s7, %s5
  // Predicated region
  $region2: #{attention_gcn_forward.5} parent=0 // pred_check
    _
  $region3: #{attention_gcn_forward.5} parent=0 // pred_check_branch
    %10 = sbr.rel (0) target = $region5
  $region4: #{attention_gcn_forward.5} parent=0 // pred_region
    _
  $region5: #{attention_gcn_forward.5} parent=0 // pred_fallthru
    _
  // Predicated region
  $region6: #{attention_gcn_forward.5} parent=0 // pred_check
    _
  $region7: #{attention_gcn_forward.5} parent=0 // pred_check_branch
    %12 = sbr.rel (0) target = $region9
  $region8: #{attention_gcn_forward.5} parent=0 // pred_region
    _
  $region9: #{attention_gcn_forward.5} parent=0 // pred_fallthru
    _
  // Predicated region
  $region10: #{attention_gcn_forward.5} parent=0 // pred_check
    _
  $region11: #{attention_gcn_forward.5} parent=0 // pred_check_branch
    %14 = sbr.rel (0) target = $region13
  $region12: #{attention_gcn_forward.5} parent=0 // pred_region
    _
  $region13: #{attention_gcn_forward.5} parent=0 // pred_fallthru
    _
  // Predicated region
  $region14: #{attention_gcn_forward.5} parent=0 // pred_check
    _
  $region15: #{attention_gcn_forward.5} parent=0 // pred_check_branch
    %16 = sbr.rel (0) target = $region17
  $region16: #{attention_gcn_forward.5} parent=0 // pred_region
    _
  $region17: #{attention_gcn_forward.5} parent=0 // pred_fallthru
    _
  %v17 = vld [vmem:[%s0] sm:$0xf]
  %v18 = vld [vmem:[%s0 + $0x4] sm:$0xf]
  %v19 = vld [vmem:[%s0 + $0x8] sm:$0xf]
  %v20 = vld [vmem:[%s0 + $0xc] sm:$0xf]
  %v21 = vld [vmem:[%s0 + $0x10] sm:$0xf]
  %v22 = vld [vmem:[%s0 + $0x14] sm:$0xf]
  %v23 = vld [vmem:[%s0 + $0x18] sm:$0xf]
  %v24 = vld [vmem:[%s0 + $0x1c] sm:$0xf]
  %v25 = vld [vmem:[%s0 + $0x20] sm:$0xf]
  %v26 = vld [vmem:[%s0 + $0x24] sm:$0xf]
  %v27 = vld [vmem:[%s0 + $0x28] sm:$0xf]
  %v28 = vld [vmem:[%s0 + $0x2c] sm:$0xf]
  %v29 = vld [vmem:[%s0 + $0x30] sm:$0xf]
  %v30 = vld [vmem:[%s0 + $0x34] sm:$0xf]
  %v31 = vld [vmem:[%s0 + $0x38] sm:$0xf]
  %v32 = vld [vmem:[%s0 + $0x3c] sm:$0xf]
  %v33 = vld [vmem:[%s1] sm:$0xf]
  %v34 = vld [vmem:[%s1 + $0x4] sm:$0xf]
  %v35 = vld [vmem:[%s1 + $0x8] sm:$0xf]
  %v36 = vld [vmem:[%s1 + $0xc] sm:$0xf]
  %v37 = vld [vmem:[%s1 + $0x10] sm:$0xf]
  %v38 = vld [vmem:[%s1 + $0x14] sm:$0xf]
  %v39 = vld [vmem:[%s1 + $0x18] sm:$0xf]
  %v40 = vld [vmem:[%s1 + $0x1c] sm:$0xf]
  %v41 = vld [vmem:[%s1 + $0x20] sm:$0xf]
  %v42 = vld [vmem:[%s1 + $0x24] sm:$0xf]
  %v43 = vld [vmem:[%s1 + $0x28] sm:$0xf]
  %v44 = vld [vmem:[%s1 + $0x2c] sm:$0xf]
  %v45 = vld [vmem:[%s1 + $0x30] sm:$0xf]
  %v46 = vld [vmem:[%s1 + $0x34] sm:$0xf]
  %v47 = vld [vmem:[%s1 + $0x38] sm:$0xf]
  %v48 = vld [vmem:[%s1 + $0x3c] sm:$0xf]
  %v65 = vunpack.c.l.b16 %v17
  %v66 = vunpack.c.l.b16 %v18
  %v67 = vunpack.c.l.b16 %v19
  %v68 = vunpack.c.l.b16 %v20
  %v69 = vunpack.c.l.b16 %v21
  %v70 = vunpack.c.l.b16 %v22
  %v71 = vunpack.c.l.b16 %v23
  %v72 = vunpack.c.l.b16 %v24
  %v73 = vunpack.c.l.b16 %v25
  %v74 = vunpack.c.l.b16 %v26
  %v75 = vunpack.c.l.b16 %v27
  %v76 = vunpack.c.l.b16 %v28
  %v77 = vunpack.c.l.b16 %v29
  %v78 = vunpack.c.l.b16 %v30
  %v79 = vunpack.c.l.b16 %v31
  %v80 = vunpack.c.l.b16 %v32
  %v81 = vpack.c.b16 %v66, %v65
  %v82 = vpack.c.b16 %v68, %v67
  %v83 = vpack.c.b16 %v70, %v69
  %v84 = vpack.c.b16 %v72, %v71
  %v85 = vpack.c.b16 %v74, %v73
  %v86 = vpack.c.b16 %v76, %v75
  %v87 = vpack.c.b16 %v78, %v77
  %v88 = vpack.c.b16 %v80, %v79
  %v113 = vunpack.c.l.b16 %v33
  %v114 = vunpack.c.l.b16 %v34
  %v115 = vunpack.c.l.b16 %v35
  %v116 = vunpack.c.l.b16 %v36
  %v117 = vunpack.c.l.b16 %v37
  %v118 = vunpack.c.l.b16 %v38
  %v119 = vunpack.c.l.b16 %v39
  %v120 = vunpack.c.l.b16 %v40
  %v121 = vunpack.c.l.b16 %v41
  %v122 = vunpack.c.l.b16 %v42
  %v123 = vunpack.c.l.b16 %v43
  %v124 = vunpack.c.l.b16 %v44
  %v125 = vunpack.c.l.b16 %v45
  %v126 = vunpack.c.l.b16 %v46
  %v127 = vunpack.c.l.b16 %v47
  %v128 = vunpack.c.l.b16 %v48
  %v129 = vpack.c.b16 %v114, %v113
  %v130 = vpack.c.b16 %v116, %v115
  %v131 = vpack.c.b16 %v118, %v117
  %v132 = vpack.c.b16 %v120, %v119
  %v133 = vpack.c.b16 %v122, %v121
  %v134 = vpack.c.b16 %v124, %v123
  %v135 = vpack.c.b16 %v126, %v125
  %v136 = vpack.c.b16 %v128, %v127
  %145 = vmatpush.bf16.msra.mxu0 %v136
  %146 = vmatpush.bf16.msra.mxu0 %v135
  %147 = vmatpush.bf16.msra.mxu0 %v134
  %148 = vmatpush.bf16.msra.mxu0 %v133
  %149 = vmatpush.bf16.msra.mxu0 %v132
  %150 = vmatpush.bf16.msra.mxu0 %v131
  %151 = vmatpush.bf16.msra.mxu0 %v130
  %152 = vmatpush.bf16.msra.mxu0 %v129
  %153 = vmatmul.bf16.gmra.mxu0 %v81
  %v154 = vpop.f32.mrf.mxu0
  %v155 = vadd.f32 0.0, %v154
  %v156 = vpop.f32.mrf.mxu0
  %v157 = vadd.f32 0.0, %v156
  %158 = vmatmul.bf16.gmra.mxu0 %v82
  %v159 = vpop.f32.mrf.mxu0
  %v160 = vadd.f32 0.0, %v159
  %v161 = vpop.f32.mrf.mxu0
  %v162 = vadd.f32 0.0, %v161
  %163 = vmatmul.bf16.gmra.mxu0 %v83
  %v164 = vpop.f32.mrf.mxu0
  %v165 = vadd.f32 0.0, %v164
  %v166 = vpop.f32.mrf.mxu0
  %v167 = vadd.f32 0.0, %v166
  %168 = vmatmul.bf16.gmra.mxu0 %v84
  %v169 = vpop.f32.mrf.mxu0
  %v170 = vadd.f32 0.0, %v169
  %v171 = vpop.f32.mrf.mxu0
  %v172 = vadd.f32 0.0, %v171
  %173 = vmatmul.bf16.gmra.mxu0 %v85
  %v174 = vpop.f32.mrf.mxu0
  %v175 = vadd.f32 0.0, %v174
  %v176 = vpop.f32.mrf.mxu0
  %v177 = vadd.f32 0.0, %v176
  %178 = vmatmul.bf16.gmra.mxu0 %v86
  %v179 = vpop.f32.mrf.mxu0
  %v180 = vadd.f32 0.0, %v179
  %v181 = vpop.f32.mrf.mxu0
  %v182 = vadd.f32 0.0, %v181
  %183 = vmatmul.bf16.gmra.mxu0 %v87
  %v184 = vpop.f32.mrf.mxu0
  %v185 = vadd.f32 0.0, %v184
  %v186 = vpop.f32.mrf.mxu0
  %v187 = vadd.f32 0.0, %v186
  %188 = vmatmul.bf16.gmra.mxu0 %v88
  %v189 = vpop.f32.mrf.mxu0
  %v190 = vadd.f32 0.0, %v189
  %v191 = vpop.f32.mrf.mxu0
  %v192 = vadd.f32 0.0, %v191
  %193 = vdwg.mxu0
  %v194 = vpack.c.bf16 %v157, %v155
  %v195 = vpack.c.bf16 %v162, %v160
  %v196 = vpack.c.bf16 %v167, %v165
  %v197 = vpack.c.bf16 %v172, %v170
  %v198 = vpack.c.bf16 %v177, %v175
  %v199 = vpack.c.bf16 %v182, %v180
  %v200 = vpack.c.bf16 %v187, %v185
  %v201 = vpack.c.bf16 %v192, %v190
  %v202 = vld [vmem:[%s2] sm:$0xf]
  %v203 = vld [vmem:[%s2 + $0x4] sm:$0xf]
  %v204 = vld [vmem:[%s2 + $0x8] sm:$0xf]
  %v205 = vld [vmem:[%s2 + $0xc] sm:$0xf]
  %v206 = vld [vmem:[%s2 + $0x10] sm:$0xf]
  %v207 = vld [vmem:[%s2 + $0x14] sm:$0xf]
  %v208 = vld [vmem:[%s2 + $0x18] sm:$0xf]
  %v209 = vld [vmem:[%s2 + $0x1c] sm:$0xf]
  %v210 = vld [vmem:[%s2 + $0x20] sm:$0xf]
  %v211 = vld [vmem:[%s2 + $0x24] sm:$0xf]
  %v212 = vld [vmem:[%s2 + $0x28] sm:$0xf]
  %v213 = vld [vmem:[%s2 + $0x2c] sm:$0xf]
  %v214 = vld [vmem:[%s2 + $0x30] sm:$0xf]
  %v215 = vld [vmem:[%s2 + $0x34] sm:$0xf]
  %v216 = vld [vmem:[%s2 + $0x38] sm:$0xf]
  %v217 = vld [vmem:[%s2 + $0x3c] sm:$0xf]
  %v218 = vld [vmem:[%s3] sm:$0x1]
  %v220 = vperm.slane %v218, 0
  %v238 = vunpack.c.l.b16 %v202
  %v239 = vunpack.c.l.b16 %v203
  %v240 = vunpack.c.l.b16 %v204
  %v241 = vunpack.c.l.b16 %v205
  %v242 = vunpack.c.l.b16 %v206
  %v243 = vunpack.c.l.b16 %v207
  %v244 = vunpack.c.l.b16 %v208
  %v245 = vunpack.c.l.b16 %v209
  %v246 = vunpack.c.l.b16 %v210
  %v247 = vunpack.c.l.b16 %v211
  %v248 = vunpack.c.l.b16 %v212
  %v249 = vunpack.c.l.b16 %v213
  %v250 = vunpack.c.l.b16 %v214
  %v251 = vunpack.c.l.b16 %v215
  %v252 = vunpack.c.l.b16 %v216
  %v253 = vunpack.c.l.b16 %v217
  %v254 = vpack.c.b16 %v239, %v238
  %v255 = vpack.c.b16 %v241, %v240
  %v256 = vpack.c.b16 %v243, %v242
  %v257 = vpack.c.b16 %v245, %v244
  %v258 = vpack.c.b16 %v247, %v246
  %v259 = vpack.c.b16 %v249, %v248
  %v260 = vpack.c.b16 %v251, %v250
  %v261 = vpack.c.b16 %v253, %v252
  %270 = vmatpush.bf16.msra.mxu0 %v261
  %271 = vmatpush.bf16.msra.mxu0 %v260
  %272 = vmatpush.bf16.msra.mxu0 %v259
  %273 = vmatpush.bf16.msra.mxu0 %v258
  %274 = vmatpush.bf16.msra.mxu0 %v257
  %275 = vmatpush.bf16.msra.mxu0 %v256
  %276 = vmatpush.bf16.msra.mxu0 %v255
  %277 = vmatpush.bf16.msra.mxu0 %v254
  %278 = vmatmul.bf16.gmra.mxu0 %v194
  %v279 = vpop.f32.mrf.mxu0
  %v280 = vadd.f32 %v220, %v279
  %v281 = vpop.f32.mrf.mxu0
  %v282 = vadd.f32 %v220, %v281
  %283 = vmatmul.bf16.gmra.mxu0 %v195
  %v284 = vpop.f32.mrf.mxu0
  %v285 = vadd.f32 %v220, %v284
  %v286 = vpop.f32.mrf.mxu0
  %v287 = vadd.f32 %v220, %v286
  %288 = vmatmul.bf16.gmra.mxu0 %v196
  %v289 = vpop.f32.mrf.mxu0
  %v290 = vadd.f32 %v220, %v289
  %v291 = vpop.f32.mrf.mxu0
  %v292 = vadd.f32 %v220, %v291
  %293 = vmatmul.bf16.gmra.mxu0 %v197
  %v294 = vpop.f32.mrf.mxu0
  %v295 = vadd.f32 %v220, %v294
  %v296 = vpop.f32.mrf.mxu0
  %v297 = vadd.f32 %v220, %v296
  %298 = vmatmul.bf16.gmra.mxu0 %v198
  %v299 = vpop.f32.mrf.mxu0
  %v300 = vadd.f32 %v220, %v299
  %v301 = vpop.f32.mrf.mxu0
  %v302 = vadd.f32 %v220, %v301
  %303 = vmatmul.bf16.gmra.mxu0 %v199
  %v304 = vpop.f32.mrf.mxu0
  %v305 = vadd.f32 %v220, %v304
  %v306 = vpop.f32.mrf.mxu0
  %v307 = vadd.f32 %v220, %v306
  %308 = vmatmul.bf16.gmra.mxu0 %v200
  %v309 = vpop.f32.mrf.mxu0
  %v310 = vadd.f32 %v220, %v309
  %v311 = vpop.f32.mrf.mxu0
  %v312 = vadd.f32 %v220, %v311
  %313 = vmatmul.bf16.gmra.mxu0 %v201
  %v314 = vpop.f32.mrf.mxu0
  %v315 = vadd.f32 %v220, %v314
  %v316 = vpop.f32.mrf.mxu0
  %v317 = vadd.f32 %v220, %v316
  %318 = vdwg.mxu0
  %319 = vst [vmem:[%s4] sm:$0xff] %v280
  %320 = vst [vmem:[%s4 + $0x8] sm:$0xff] %v282
  %321 = vst [vmem:[%s4 + $0x10] sm:$0xff] %v285
  %322 = vst [vmem:[%s4 + $0x18] sm:$0xff] %v287
  %323 = vst [vmem:[%s4 + $0x20] sm:$0xff] %v290
  %324 = vst [vmem:[%s4 + $0x28] sm:$0xff] %v292
  %325 = vst [vmem:[%s4 + $0x30] sm:$0xff] %v295
  %326 = vst [vmem:[%s4 + $0x38] sm:$0xff] %v297
  %327 = vst [vmem:[%s4 + $0x40] sm:$0xff] %v300
  %328 = vst [vmem:[%s4 + $0x48] sm:$0xff] %v302
  %329 = vst [vmem:[%s4 + $0x50] sm:$0xff] %v305
  %330 = vst [vmem:[%s4 + $0x58] sm:$0xff] %v307
  %331 = vst [vmem:[%s4 + $0x60] sm:$0xff] %v310
  %332 = vst [vmem:[%s4 + $0x68] sm:$0xff] %v312
  %333 = vst [vmem:[%s4 + $0x70] sm:$0xff] %v315
  %334 = vst [vmem:[%s4 + $0x78] sm:$0xff] %v317
  // Predicated region
  $region18: #{attention_gcn_forward.5} parent=0 // pred_check
    _
  $region19: #{attention_gcn_forward.5} parent=0 // pred_check_branch
    %336 = sbr.rel (0) target = $region21
  $region20: #{attention_gcn_forward.5} parent=0 // pred_region
    _
  $region21: #{attention_gcn_forward.5} parent=0 // pred_fallthru
    _
  // Predicated region
  $region22: #{attention_gcn_forward.5} parent=0 // pred_check
    _
  $region23: #{attention_gcn_forward.5} parent=0 // pred_check_branch
    %338 = sbr.rel (0) target = $region25
  $region24: #{attention_gcn_forward.5} parent=0 // pred_region
    _
  $region25: #{attention_gcn_forward.5} parent=0 // pred_fallthru
    _

// kernel: attention_gcn_forward.3
$region0: #{attention_gcn_forward.3}
  #allocation0 [shape = 'u32[]', space=smem, size = 0x4, offset = 0x4, fixed_abs, tag = 'smem constant byte address 0x4 - core index']
  #allocation1 [shape = 'u32[72,128]{1,0:T(1,128)}', space=vmem, size = 0x9000, scoped, tag = 'internal scratch']
  %s0 = inlined_call_operand.vmem [shape: bf16[128,128], index: 0, kind: input, shape index: {}]
  %s1 = inlined_call_operand.vmem [shape: bf16[128,128], index: 1, kind: input, shape index: {}]
  %s2 = inlined_call_operand.vmem [shape: bf16[128,128], index: 2, kind: input, shape index: {}]
  %s3 = inlined_call_operand.vmem [shape: f32[1,128], index: 3, kind: input, shape index: {}]
  %s4 = inlined_call_operand.vmem [shape: bf16[128,128], index: 4, kind: output, shape index: {}]
  %s5 = sld [smem:[#allocation0]]
  $region26: #{attention_gcn_forward.3} parent=0
    _
  %s7 = ssub.s32 1, %s5
  %s8 = scalar_select 0, %s7, %s5
  // Predicated region
  $region2: #{attention_gcn_forward.3} parent=0 // pred_check
    _
  $region3: #{attention_gcn_forward.3} parent=0 // pred_check_branch
    %10 = sbr.rel (0) target = $region5
  $region4: #{attention_gcn_forward.3} parent=0 // pred_region
    _
  $region5: #{attention_gcn_forward.3} parent=0 // pred_fallthru
    _
  // Predicated region
  $region6: #{attention_gcn_forward.3} parent=0 // pred_check
    _
  $region7: #{attention_gcn_forward.3} parent=0 // pred_check_branch
    %12 = sbr.rel (0) target = $region9
  $region8: #{attention_gcn_forward.3} parent=0 // pred_region
    _
  $region9: #{attention_gcn_forward.3} parent=0 // pred_fallthru
    _
  // Predicated region
  $region10: #{attention_gcn_forward.3} parent=0 // pred_check
    _
  $region11: #{attention_gcn_forward.3} parent=0 // pred_check_branch
    %14 = sbr.rel (0) target = $region13
  $region12: #{attention_gcn_forward.3} parent=0 // pred_region
    _
  $region13: #{attention_gcn_forward.3} parent=0 // pred_fallthru
    _
  // Predicated region
  $region14: #{attention_gcn_forward.3} parent=0 // pred_check
    _
  $region15: #{attention_gcn_forward.3} parent=0 // pred_check_branch
    %16 = sbr.rel (0) target = $region17
  $region16: #{attention_gcn_forward.3} parent=0 // pred_region
    _
  $region17: #{attention_gcn_forward.3} parent=0 // pred_fallthru
    _
  %v17 = vld [vmem:[%s0] sm:$0xf]
  %v18 = vld [vmem:[%s0 + $0x4] sm:$0xf]
  %v19 = vld [vmem:[%s0 + $0x8] sm:$0xf]
  %v20 = vld [vmem:[%s0 + $0xc] sm:$0xf]
  %v21 = vld [vmem:[%s0 + $0x10] sm:$0xf]
  %v22 = vld [vmem:[%s0 + $0x14] sm:$0xf]
  %v23 = vld [vmem:[%s0 + $0x18] sm:$0xf]
  %v24 = vld [vmem:[%s0 + $0x1c] sm:$0xf]
  %v25 = vld [vmem:[%s0 + $0x20] sm:$0xf]
  %v26 = vld [vmem:[%s0 + $0x24] sm:$0xf]
  %v27 = vld [vmem:[%s0 + $0x28] sm:$0xf]
  %v28 = vld [vmem:[%s0 + $0x2c] sm:$0xf]
  %v29 = vld [vmem:[%s0 + $0x30] sm:$0xf]
  %v30 = vld [vmem:[%s0 + $0x34] sm:$0xf]
  %v31 = vld [vmem:[%s0 + $0x38] sm:$0xf]
  %v32 = vld [vmem:[%s0 + $0x3c] sm:$0xf]
  %v33 = vld [vmem:[%s1] sm:$0xf]
  %v34 = vld [vmem:[%s1 + $0x4] sm:$0xf]
  %v35 = vld [vmem:[%s1 + $0x8] sm:$0xf]
  %v36 = vld [vmem:[%s1 + $0xc] sm:$0xf]
  %v37 = vld [vmem:[%s1 + $0x10] sm:$0xf]
  %v38 = vld [vmem:[%s1 + $0x14] sm:$0xf]
  %v39 = vld [vmem:[%s1 + $0x18] sm:$0xf]
  %v40 = vld [vmem:[%s1 + $0x1c] sm:$0xf]
  %v41 = vld [vmem:[%s1 + $0x20] sm:$0xf]
  %v42 = vld [vmem:[%s1 + $0x24] sm:$0xf]
  %v43 = vld [vmem:[%s1 + $0x28] sm:$0xf]
  %v44 = vld [vmem:[%s1 + $0x2c] sm:$0xf]
  %v45 = vld [vmem:[%s1 + $0x30] sm:$0xf]
  %v46 = vld [vmem:[%s1 + $0x34] sm:$0xf]
  %v47 = vld [vmem:[%s1 + $0x38] sm:$0xf]
  %v48 = vld [vmem:[%s1 + $0x3c] sm:$0xf]
  %v65 = vunpack.c.l.b16 %v17
  %v66 = vunpack.c.l.b16 %v18
  %v67 = vunpack.c.l.b16 %v19
  %v68 = vunpack.c.l.b16 %v20
  %v69 = vunpack.c.l.b16 %v21
  %v70 = vunpack.c.l.b16 %v22
  %v71 = vunpack.c.l.b16 %v23
  %v72 = vunpack.c.l.b16 %v24
  %v73 = vunpack.c.l.b16 %v25
  %v74 = vunpack.c.l.b16 %v26
  %v75 = vunpack.c.l.b16 %v27
  %v76 = vunpack.c.l.b16 %v28
  %v77 = vunpack.c.l.b16 %v29
  %v78 = vunpack.c.l.b16 %v30
  %v79 = vunpack.c.l.b16 %v31
  %v80 = vunpack.c.l.b16 %v32
  %v81 = vpack.c.b16 %v66, %v65
  %v82 = vpack.c.b16 %v68, %v67
  %v83 = vpack.c.b16 %v70, %v69
  %v84 = vpack.c.b16 %v72, %v71
  %v85 = vpack.c.b16 %v74, %v73
  %v86 = vpack.c.b16 %v76, %v75
  %v87 = vpack.c.b16 %v78, %v77
  %v88 = vpack.c.b16 %v80, %v79
  %v113 = vunpack.c.l.b16 %v33
  %v114 = vunpack.c.l.b16 %v34
  %v115 = vunpack.c.l.b16 %v35
  %v116 = vunpack.c.l.b16 %v36
  %v117 = vunpack.c.l.b16 %v37
  %v118 = vunpack.c.l.b16 %v38
  %v119 = vunpack.c.l.b16 %v39
  %v120 = vunpack.c.l.b16 %v40
  %v121 = vunpack.c.l.b16 %v41
  %v122 = vunpack.c.l.b16 %v42
  %v123 = vunpack.c.l.b16 %v43
  %v124 = vunpack.c.l.b16 %v44
  %v125 = vunpack.c.l.b16 %v45
  %v126 = vunpack.c.l.b16 %v46
  %v127 = vunpack.c.l.b16 %v47
  %v128 = vunpack.c.l.b16 %v48
  %v129 = vpack.c.b16 %v114, %v113
  %v130 = vpack.c.b16 %v116, %v115
  %v131 = vpack.c.b16 %v118, %v117
  %v132 = vpack.c.b16 %v120, %v119
  %v133 = vpack.c.b16 %v122, %v121
  %v134 = vpack.c.b16 %v124, %v123
  %v135 = vpack.c.b16 %v126, %v125
  %v136 = vpack.c.b16 %v128, %v127
  %145 = vmatpush.bf16.msra.mxu0 %v136
  %146 = vmatpush.bf16.msra.mxu0 %v135
  %147 = vmatpush.bf16.msra.mxu0 %v134
  %148 = vmatpush.bf16.msra.mxu0 %v133
  %149 = vmatpush.bf16.msra.mxu0 %v132
  %150 = vmatpush.bf16.msra.mxu0 %v131
  %151 = vmatpush.bf16.msra.mxu0 %v130
  %152 = vmatpush.bf16.msra.mxu0 %v129
  %153 = vmatmul.bf16.gmra.mxu0 %v81
  %v154 = vpop.f32.mrf.mxu0
  %v155 = vadd.f32 0.0, %v154
  %v156 = vpop.f32.mrf.mxu0
  %v157 = vadd.f32 0.0, %v156
  %158 = vmatmul.bf16.gmra.mxu0 %v82
  %v159 = vpop.f32.mrf.mxu0
  %v160 = vadd.f32 0.0, %v159
  %v161 = vpop.f32.mrf.mxu0
  %v162 = vadd.f32 0.0, %v161
  %163 = vmatmul.bf16.gmra.mxu0 %v83
  %v164 = vpop.f32.mrf.mxu0
  %v165 = vadd.f32 0.0, %v164
  %v166 = vpop.f32.mrf.mxu0
  %v167 = vadd.f32 0.0, %v166
  %168 = vmatmul.bf16.gmra.mxu0 %v84
  %v169 = vpop.f32.mrf.mxu0
  %v170 = vadd.f32 0.0, %v169
  %v171 = vpop.f32.mrf.mxu0
  %v172 = vadd.f32 0.0, %v171
  %173 = vmatmul.bf16.gmra.mxu0 %v85
  %v174 = vpop.f32.mrf.mxu0
  %v175 = vadd.f32 0.0, %v174
  %v176 = vpop.f32.mrf.mxu0
  %v177 = vadd.f32 0.0, %v176
  %178 = vmatmul.bf16.gmra.mxu0 %v86
  %v179 = vpop.f32.mrf.mxu0
  %v180 = vadd.f32 0.0, %v179
  %v181 = vpop.f32.mrf.mxu0
  %v182 = vadd.f32 0.0, %v181
  %183 = vmatmul.bf16.gmra.mxu0 %v87
  %v184 = vpop.f32.mrf.mxu0
  %v185 = vadd.f32 0.0, %v184
  %v186 = vpop.f32.mrf.mxu0
  %v187 = vadd.f32 0.0, %v186
  %188 = vmatmul.bf16.gmra.mxu0 %v88
  %v189 = vpop.f32.mrf.mxu0
  %v190 = vadd.f32 0.0, %v189
  %v191 = vpop.f32.mrf.mxu0
  %v192 = vadd.f32 0.0, %v191
  %193 = vdwg.mxu0
  %v194 = vpack.c.bf16 %v157, %v155
  %v195 = vpack.c.bf16 %v162, %v160
  %v196 = vpack.c.bf16 %v167, %v165
  %v197 = vpack.c.bf16 %v172, %v170
  %v198 = vpack.c.bf16 %v177, %v175
  %v199 = vpack.c.bf16 %v182, %v180
  %v200 = vpack.c.bf16 %v187, %v185
  %v201 = vpack.c.bf16 %v192, %v190
  %v202 = vld [vmem:[%s2] sm:$0xf]
  %v203 = vld [vmem:[%s2 + $0x4] sm:$0xf]
  %v204 = vld [vmem:[%s2 + $0x8] sm:$0xf]
  %v205 = vld [vmem:[%s2 + $0xc] sm:$0xf]
  %v206 = vld [vmem:[%s2 + $0x10] sm:$0xf]
  %v207 = vld [vmem:[%s2 + $0x14] sm:$0xf]
  %v208 = vld [vmem:[%s2 + $0x18] sm:$0xf]
  %v209 = vld [vmem:[%s2 + $0x1c] sm:$0xf]
  %v210 = vld [vmem:[%s2 + $0x20] sm:$0xf]
  %v211 = vld [vmem:[%s2 + $0x24] sm:$0xf]
  %v212 = vld [vmem:[%s2 + $0x28] sm:$0xf]
  %v213 = vld [vmem:[%s2 + $0x2c] sm:$0xf]
  %v214 = vld [vmem:[%s2 + $0x30] sm:$0xf]
  %v215 = vld [vmem:[%s2 + $0x34] sm:$0xf]
  %v216 = vld [vmem:[%s2 + $0x38] sm:$0xf]
  %v217 = vld [vmem:[%s2 + $0x3c] sm:$0xf]
  %v218 = vld [vmem:[%s3] sm:$0x1]
  %v220 = vperm.slane %v218, 0
  %v238 = vunpack.c.l.b16 %v202
  %v239 = vunpack.c.l.b16 %v203
  %v240 = vunpack.c.l.b16 %v204
  %v241 = vunpack.c.l.b16 %v205
  %v242 = vunpack.c.l.b16 %v206
  %v243 = vunpack.c.l.b16 %v207
  %v244 = vunpack.c.l.b16 %v208
  %v245 = vunpack.c.l.b16 %v209
  %v246 = vunpack.c.l.b16 %v210
  %v247 = vunpack.c.l.b16 %v211
  %v248 = vunpack.c.l.b16 %v212
  %v249 = vunpack.c.l.b16 %v213
  %v250 = vunpack.c.l.b16 %v214
  %v251 = vunpack.c.l.b16 %v215
  %v252 = vunpack.c.l.b16 %v216
  %v253 = vunpack.c.l.b16 %v217
  %v254 = vpack.c.b16 %v239, %v238
  %v255 = vpack.c.b16 %v241, %v240
  %v256 = vpack.c.b16 %v243, %v242
  %v257 = vpack.c.b16 %v245, %v244
  %v258 = vpack.c.b16 %v247, %v246
  %v259 = vpack.c.b16 %v249, %v248
  %v260 = vpack.c.b16 %v251, %v250
  %v261 = vpack.c.b16 %v253, %v252
  %270 = vmatpush.bf16.msra.mxu0 %v261
  %271 = vmatpush.bf16.msra.mxu0 %v260
  %272 = vmatpush.bf16.msra.mxu0 %v259
  %273 = vmatpush.bf16.msra.mxu0 %v258
  %274 = vmatpush.bf16.msra.mxu0 %v257
  %275 = vmatpush.bf16.msra.mxu0 %v256
  %276 = vmatpush.bf16.msra.mxu0 %v255
  %277 = vmatpush.bf16.msra.mxu0 %v254
  %278 = vmatmul.bf16.gmra.mxu0 %v194
  %v279 = vpop.f32.mrf.mxu0
  %v280 = vadd.f32 %v220, %v279
  %v281 = vpop.f32.mrf.mxu0
  %v282 = vadd.f32 %v220, %v281
  %283 = vmatmul.bf16.gmra.mxu0 %v195
  %v284 = vpop.f32.mrf.mxu0
  %v285 = vadd.f32 %v220, %v284
  %v286 = vpop.f32.mrf.mxu0
  %v287 = vadd.f32 %v220, %v286
  %288 = vmatmul.bf16.gmra.mxu0 %v196
  %v289 = vpop.f32.mrf.mxu0
  %v290 = vadd.f32 %v220, %v289
  %v291 = vpop.f32.mrf.mxu0
  %v292 = vadd.f32 %v220, %v291
  %293 = vmatmul.bf16.gmra.mxu0 %v197
  %v294 = vpop.f32.mrf.mxu0
  %v295 = vadd.f32 %v220, %v294
  %v296 = vpop.f32.mrf.mxu0
  %v297 = vadd.f32 %v220, %v296
  %298 = vmatmul.bf16.gmra.mxu0 %v198
  %v299 = vpop.f32.mrf.mxu0
  %v300 = vadd.f32 %v220, %v299
  %v301 = vpop.f32.mrf.mxu0
  %v302 = vadd.f32 %v220, %v301
  %303 = vmatmul.bf16.gmra.mxu0 %v199
  %v304 = vpop.f32.mrf.mxu0
  %v305 = vadd.f32 %v220, %v304
  %v306 = vpop.f32.mrf.mxu0
  %v307 = vadd.f32 %v220, %v306
  %308 = vmatmul.bf16.gmra.mxu0 %v200
  %v309 = vpop.f32.mrf.mxu0
  %v310 = vadd.f32 %v220, %v309
  %v311 = vpop.f32.mrf.mxu0
  %v312 = vadd.f32 %v220, %v311
  %313 = vmatmul.bf16.gmra.mxu0 %v201
  %v314 = vpop.f32.mrf.mxu0
  %v315 = vadd.f32 %v220, %v314
  %v316 = vpop.f32.mrf.mxu0
  %v317 = vadd.f32 %v220, %v316
  %318 = vdwg.mxu0
  %v319 = vmax.f32 %v280, 0.0
  %v320 = vmax.f32 %v282, 0.0
  %v321 = vmax.f32 %v285, 0.0
  %v322 = vmax.f32 %v287, 0.0
  %v323 = vmax.f32 %v290, 0.0
  %v324 = vmax.f32 %v292, 0.0
  %v325 = vmax.f32 %v295, 0.0
  %v326 = vmax.f32 %v297, 0.0
  %v327 = vmax.f32 %v300, 0.0
  %v328 = vmax.f32 %v302, 0.0
  %v329 = vmax.f32 %v305, 0.0
  %v330 = vmax.f32 %v307, 0.0
  %v331 = vmax.f32 %v310, 0.0
  %v332 = vmax.f32 %v312, 0.0
  %v333 = vmax.f32 %v315, 0.0
  %v334 = vmax.f32 %v317, 0.0
  %v335 = vpack.c.bf16 %v319, %v319
  %v336 = vpack.c.bf16 %v320, %v320
  %v337 = vpack.c.bf16 %v321, %v321
  %v338 = vpack.c.bf16 %v322, %v322
  %v339 = vpack.c.bf16 %v323, %v323
  %v340 = vpack.c.bf16 %v324, %v324
  %v341 = vpack.c.bf16 %v325, %v325
  %v342 = vpack.c.bf16 %v326, %v326
  %v343 = vpack.c.bf16 %v327, %v327
  %v344 = vpack.c.bf16 %v328, %v328
  %v345 = vpack.c.bf16 %v329, %v329
  %v346 = vpack.c.bf16 %v330, %v330
  %v347 = vpack.c.bf16 %v331, %v331
  %v348 = vpack.c.bf16 %v332, %v332
  %v349 = vpack.c.bf16 %v333, %v333
  %v350 = vpack.c.bf16 %v334, %v334
  %351 = vst [vmem:[%s4] sm:$0xf] %v335
  %352 = vst [vmem:[%s4 + $0x4] sm:$0xf] %v336
  %353 = vst [vmem:[%s4 + $0x8] sm:$0xf] %v337
  %354 = vst [vmem:[%s4 + $0xc] sm:$0xf] %v338
  %355 = vst [vmem:[%s4 + $0x10] sm:$0xf] %v339
  %356 = vst [vmem:[%s4 + $0x14] sm:$0xf] %v340
  %357 = vst [vmem:[%s4 + $0x18] sm:$0xf] %v341
  %358 = vst [vmem:[%s4 + $0x1c] sm:$0xf] %v342
  %359 = vst [vmem:[%s4 + $0x20] sm:$0xf] %v343
  %360 = vst [vmem:[%s4 + $0x24] sm:$0xf] %v344
  %361 = vst [vmem:[%s4 + $0x28] sm:$0xf] %v345
  %362 = vst [vmem:[%s4 + $0x2c] sm:$0xf] %v346
  %363 = vst [vmem:[%s4 + $0x30] sm:$0xf] %v347
  %364 = vst [vmem:[%s4 + $0x34] sm:$0xf] %v348
  %365 = vst [vmem:[%s4 + $0x38] sm:$0xf] %v349
  %366 = vst [vmem:[%s4 + $0x3c] sm:$0xf] %v350
  // Predicated region
  $region18: #{attention_gcn_forward.3} parent=0 // pred_check
    _
  $region19: #{attention_gcn_forward.3} parent=0 // pred_check_branch
    %368 = sbr.rel (0) target = $region21
  $region20: #{attention_gcn_forward.3} parent=0 // pred_region
    _
  $region21: #{attention_gcn_forward.3} parent=0 // pred_fallthru
    _
  // Predicated region
  $region22: #{attention_gcn_forward.3} parent=0 // pred_check
    _
  $region23: #{attention_gcn_forward.3} parent=0 // pred_check_branch
    %370 = sbr.rel (0) target = $region25
  $region24: #{attention_gcn_forward.3} parent=0 // pred_region
    _
  $region25: #{attention_gcn_forward.3} parent=0 // pred_fallthru
    _

</llo_original>
